<compile_context>
chip_gen: v6e
topology: v6e:2x2x1
jax: 0.10.0
libtpu: 0.0.40
codegen_flags: <defaults>
</compile_context>

<pallas_src>
import functools

import jax
import jax.numpy as jnp
from jax.experimental import pallas as pl
from jax.experimental.pallas import tpu as pltpu

_LANE = 128
_SUB_ROWS = 512   # rows per inner compute sub-chunk (bounds VMEM temporaries)
_TM_CAP = 8192    # rows per DMA block: 8192*128*(4+2)B = 6 MiB per buffer set


def _focal_kernel(preds_ref, labels_ref, out_ref, *,
                  alpha, gamma, tm, sub, rows, full_rows, rem):
    """Grid is (n_cores, nb); each step processes one (tm, 128) row block.

    out_ref is a per-core (1, 8, 128) f32 partial-sum accumulator (output block
    revisited across the inner axis); the wrapper sums it and divides by n.
    """
    c = pl.program_id(0)
    i = pl.program_id(1)
    nb = pl.num_programs(1)
    blk = c * nb + i          # logical row-block id (row-major over both cores)
    row0 = blk * tm           # first global row of this block

    @pl.when(i == 0)
    def _():
        out_ref[...] = jnp.zeros_like(out_ref)

    n_sub = tm // sub

    def elementwise_loss(x, y):
        eps = 1e-7
        p = jax.nn.sigmoid(x)
        # Small-integer gamma (default 2) -> plain VPU multiplies instead of
        # jnp.power (which lowers to exp(g*log(x)) on the single EUP slot).
        if float(gamma) == float(int(gamma)) and 1 <= int(gamma) <= 4:
            g = int(gamma)
            pow_1mp = 1.0 - p
            pow_p = p
            for _ in range(g - 1):
                pow_1mp = pow_1mp * (1.0 - p)
                pow_p = pow_p * p
        else:
            pow_1mp = jnp.power(1.0 - p, gamma)
            pow_p = jnp.power(p, gamma)
        # loss_1 = -alpha     * (1-p)^gamma * log(p+eps)   * y
        # loss_0 = -(1-alpha) *   p^gamma   * log(1-p+eps) * (1-y)
        loss_1 = -alpha * pow_1mp * jnp.log(p + eps) * y
        loss_0 = -(1.0 - alpha) * pow_p * jnp.log(1.0 - p + eps) * (1.0 - y)
        return loss_0 + loss_1

    def accumulate(masked):
        def body(j):
            r = j * sub
            if not isinstance(r, int):
                r = pl.multiple_of(r, sub)
            x = preds_ref[pl.ds(r, sub), :].astype(jnp.float32)
            y = labels_ref[pl.ds(r, sub), :].astype(jnp.float32)
            loss = elementwise_loss(x, y)
            if masked:
                # Row/lane mask (no flat element index -> no int32 overflow).
                lrow = jax.lax.broadcasted_iota(jnp.int32, (sub, _LANE), 0)
                grow = lrow + (row0 + r)           # global row index
                valid = grow < full_rows
                if rem:
                    col = jax.lax.broadcasted_iota(jnp.int32, (sub, _LANE), 1)
                    valid = valid | ((grow == full_rows) & (col < rem))
                loss = jnp.where(valid, loss, 0.0)
            # Fold (sub,128) onto the fixed (1,8,128) accumulator (layout-free
            # reshape + vreg adds).
            out_ref[...] += loss.reshape(1, sub // 8, 8, _LANE).sum(axis=1)

        if n_sub == 1:
            body(0)
        else:
            pl.loop(0, n_sub)(body)

    # Fully valid block: every row in [row0, row0+tm) is completely valid.
    @pl.when(row0 + tm <= full_rows)
    def _():
        accumulate(masked=False)

    # Edge block: contains the ragged tail (zero-padded lanes and/or
    # Pallas-padded garbage rows). Blocks entirely past the data (row0 >= rows,
    # only possible for the clamped phantom block of the 2-core split) skipped.
    @pl.when((row0 + tm > full_rows) & (row0 < rows))
    def _():
        accumulate(masked=True)


def focal_loss_binary(preds, labels, alpha=0.25, gamma=2.0, *, labels_bf16=True):
    assert preds.shape == labels.shape
    n = preds.size
    assert n > 0

    full_rows = n // _LANE          # number of completely valid rows
    rem = n % _LANE                 # valid lanes in the (single) partial row

    pf = preds.reshape(-1)
    lf = labels
    if labels_bf16 and lf.dtype != jnp.bfloat16:
        # Exact for 0/1 (hard) labels; halves label HBM traffic.
        lf = lf.astype(jnp.bfloat16)
    lf = lf.reshape(-1)

    # Pad only to the next multiple of 8*128 = 1024 elements so the row count
    # is a multiple of 8. For the common case n % 1024 == 0 there is no pad
    # copy at all; the kernel masks padded/garbage elements of the edge block.
    padded = -(-n // (8 * _LANE)) * (8 * _LANE)
    if padded != n:
        pf = jnp.pad(pf, (0, padded - n))
        lf = jnp.pad(lf, (0, padded - n))
    rows = padded // _LANE
    pf = pf.reshape(rows, _LANE)
    lf = lf.reshape(rows, _LANE)

    # Block (tm) / sub-chunk (sub) sizing: large DMA blocks to amortize the
    # per-grid-step overhead, small inner chunks to bound live temporaries.
    if rows <= _SUB_ROWS:
        sub = tm = rows                                   # multiple of 8
    else:
        sub = _SUB_ROWS
        tm = min(_TM_CAP, (rows // sub) * sub)            # tm <= rows, tm % sub == 0

    nb_total = -(-rows // tm)                             # real row blocks
    n_cores = 2 if nb_total >= 2 else 1                   # v7x: use both TCs
    nb = -(-nb_total // n_cores)                          # sequential steps per core
    last_blk = nb_total - 1

    # Clamp phantom blocks (only when nb_total is odd) to a valid block index;
    # the kernel skips their contribution anyway.
    in_map = lambda c, i: (jnp.minimum(c * nb + i, last_blk), 0)

    block_bytes = tm * _LANE * (pf.dtype.itemsize + lf.dtype.itemsize)
    vmem_limit = int(min(48 * 1024 * 1024, 2 * block_bytes + (16 << 20)))

    kernel = functools.partial(
        _focal_kernel,
        alpha=float(alpha), gamma=float(gamma),
        tm=int(tm), sub=int(sub),
        rows=int(rows), full_rows=int(full_rows), rem=int(rem),
    )

    out = pl.pallas_call(
        kernel,
        out_shape=jax.ShapeDtypeStruct((n_cores, 8, _LANE), jnp.float32),
        grid_spec=pltpu.PrefetchScalarGridSpec(
            num_scalar_prefetch=0,
            grid=(n_cores, nb),
            in_specs=[
                pl.BlockSpec((tm, _LANE), in_map),
                pl.BlockSpec((tm, _LANE), in_map),
            ],
            out_specs=pl.BlockSpec((1, 8, _LANE), lambda c, i: (c, 0, 0)),
        ),
        compiler_params=pltpu.CompilerParams(
            # Core-split axis parallel (v7x megacore); reduction axis arbitrary.
            dimension_semantics=("parallel", "arbitrary"),
            vmem_limit_bytes=vmem_limit,
        ),
    )(pf, lf)
    # Per-core lane-dense partial sums -> scalar mean.
    return jnp.sum(out) * (1.0 / n)


def _reference(preds, labels, alpha=0.25, gamma=2.0):
    eps = 1e-7
    p = jax.nn.sigmoid(preds.astype(jnp.float32))
    y = labels.astype(jnp.float32)
    loss_1 = -alpha * jnp.power(1 - p, gamma) * jnp.log(p + eps) * y
    loss_0 = -(1 - alpha) * jnp.power(p, gamma) * jnp.log(1 - p + eps) * (1 - y)
    return jnp.mean(loss_0 + loss_1)


if __name__ == "__main__":
    key = jax.random.PRNGKey(0)
    k1, k2 = jax.random.split(key)

    # NCHW logits and binary labels, small shapes (single fully-valid block).
    preds = jax.random.normal(k1, (2, 4, 16, 16), dtype=jnp.float32)
    labels = (jax.random.uniform(k2, (2, 4, 16, 16)) > 0.5).astype(jnp.float32)
    loss = focal_loss_binary(preds, labels, alpha=0.25, gamma=2.0)
    jax.block_until_ready(loss)
    ref = _reference(preds, labels)
    assert jnp.allclose(loss, ref, atol=1e-5, rtol=1e-5), (loss, ref)

    # Ragged, non-multiple-of-128 size: exercises the lane-masked edge block.
    k3, k4 = jax.random.split(k1)
    p2 = jax.random.normal(k3, (3, 5, 7), dtype=jnp.float32)
    l2 = (jax.random.uniform(k4, (3, 5, 7)) > 0.5).astype(jnp.float32)
    loss2 = focal_loss_binary(p2, l2)
    jax.block_until_ready(loss2)
    ref2 = _reference(p2, l2)
    assert jnp.allclose(loss2, ref2, atol=1e-5, rtol=1e-5), (loss2, ref2)

    # Multi-block case: exercises the inner sub-chunk loop, the 2-core grid
    # split, and the row-masked edge block.
    k5, k6 = jax.random.split(k2)
    p3 = jax.random.normal(k5, (2, 4, 136, 128), dtype=jnp.float32)
    l3 = (jax.random.uniform(k6, (2, 4, 136, 128)) > 0.5).astype(jnp.float32)
    loss3 = focal_loss_binary(p3, l3)
    jax.block_until_ready(loss3)
    ref3 = _reference(p3, l3)
    assert jnp.allclose(loss3, ref3, atol=1e-5, rtol=1e-5), (loss3, ref3)

    print("KERNEL_OK")
</pallas_src>

<mosaic_0001>
module attributes {stable_mosaic.version = 11 : i64} {
  func.func @_focal_kernel(%arg0: i32, %arg1: i32, %arg2: memref<16x128xf32, #tpu.memory_space<vmem>>, %arg3: memref<16x128xbf16, #tpu.memory_space<vmem>>, %arg4: memref<1x8x128xf32, #tpu.memory_space<vmem>>) attributes {dimension_semantics = [#tpu.dimension_semantics<parallel>, #tpu.dimension_semantics<arbitrary>], iteration_bounds = array<i64: 1, 1>, scalar_prefetch = 0 : i64, scratch_operands = 0 : i64, tpu.core_type = #tpu.core_type<tc>, window_params = [{transform_indices = @transform_0, window_bounds = array<i64: 16, 128>}, {transform_indices = @transform_1, window_bounds = array<i64: 16, 128>}, {transform_indices = @transform_2, window_bounds = array<i64: 1, 8, 128>}]} {
    %c1_i32 = arith.constant 1 : i32
    %0 = arith.muli %arg0, %c1_i32 : i32
    %1 = arith.addi %0, %arg1 : i32
    %c16_i32 = arith.constant 16 : i32
    %2 = arith.muli %1, %c16_i32 : i32
    %c0_i32 = arith.constant 0 : i32
    %3 = arith.cmpi eq, %arg1, %c0_i32 : i32
    %4 = arith.extui %3 : i1 to i32
    %c0_i32_0 = arith.constant 0 : i32
    %5 = arith.cmpi ne, %4, %c0_i32_0 : i32
    scf.if %5 {
      %cst = arith.constant 0.000000e+00 : f32
      %16 = vector.broadcast %cst : f32 to vector<1x8x128xf32>
      %c0 = arith.constant 0 : index
      %c0_8 = arith.constant 0 : index
      %c0_9 = arith.constant 0 : index
      %17 = vector.load %arg4[%c0, %c0_8, %c0_9] : memref<1x8x128xf32, #tpu.memory_space<vmem>>, vector<1x8x128xf32>
      tpu.vector_store %arg4[%c0, %c0_8, %c0_9], %16 {strides = array<i32>} : memref<1x8x128xf32, #tpu.memory_space<vmem>>, vector<1x8x128xf32>,
    } else {
    }
    %c16_i32_1 = arith.constant 16 : i32
    %6 = arith.addi %2, %c16_i32_1 : i32
    %c16_i32_2 = arith.constant 16 : i32
    %7 = arith.cmpi sle, %6, %c16_i32_2 : i32
    %8 = arith.extui %7 : i1 to i32
    %c0_i32_3 = arith.constant 0 : i32
    %9 = arith.cmpi ne, %8, %c0_i32_3 : i32
    scf.if %9 {
      %c0 = arith.constant 0 : index
      %c0_8 = arith.constant 0 : index
      %16 = vector.load %arg2[%c0, %c0_8] : memref<16x128xf32, #tpu.memory_space<vmem>>, vector<16x128xf32>
      %c0_9 = arith.constant 0 : index
      %c0_10 = arith.constant 0 : index
      %17 = vector.load %arg3[%c0_9, %c0_10] : memref<16x128xbf16, #tpu.memory_space<vmem>>, vector<16x128xbf16>
      %18 = arith.extf %17 : vector<16x128xbf16> to vector<16x128xf32>
      %19 = arith.negf %16 : vector<16x128xf32>
      %20 = math.exp %19 : vector<16x128xf32>
      %cst = arith.constant 1.000000e+00 : f32
      %21 = vector.broadcast %cst : f32 to vector<16x128xf32>
      %22 = arith.addf %21, %20 : vector<16x128xf32>
      %23 = arith.divf %21, %22 : vector<16x128xf32>
      %cst_11 = arith.constant 1.000000e+00 : f32
      %24 = vector.broadcast %cst_11 : f32 to vector<16x128xf32>
      %25 = arith.subf %24, %23 : vector<16x128xf32>
      %cst_12 = arith.constant 1.000000e+00 : f32
      %26 = vector.broadcast %cst_12 : f32 to vector<16x128xf32>
      %27 = arith.subf %26, %23 : vector<16x128xf32>
      %28 = arith.mulf %25, %27 : vector<16x128xf32>
      %29 = arith.mulf %23, %23 : vector<16x128xf32>
      %cst_13 = arith.constant -2.500000e-01 : f32
      %30 = vector.broadcast %cst_13 : f32 to vector<16x128xf32>
      %31 = arith.mulf %30, %28 : vector<16x128xf32>
      %cst_14 = arith.constant 1.000000e-07 : f32
      %32 = vector.broadcast %cst_14 : f32 to vector<16x128xf32>
      %33 = arith.addf %23, %32 : vector<16x128xf32>
      %34 = math.log %33 : vector<16x128xf32>
      %35 = arith.mulf %31, %34 : vector<16x128xf32>
      %36 = arith.mulf %35, %18 : vector<16x128xf32>
      %cst_15 = arith.constant -7.500000e-01 : f32
      %37 = vector.broadcast %cst_15 : f32 to vector<16x128xf32>
      %38 = arith.mulf %37, %29 : vector<16x128xf32>
      %cst_16 = arith.constant 1.000000e+00 : f32
      %39 = vector.broadcast %cst_16 : f32 to vector<16x128xf32>
      %40 = arith.subf %39, %23 : vector<16x128xf32>
      %cst_17 = arith.constant 1.000000e-07 : f32
      %41 = vector.broadcast %cst_17 : f32 to vector<16x128xf32>
      %42 = arith.addf %40, %41 : vector<16x128xf32>
      %43 = math.log %42 : vector<16x128xf32>
      %44 = arith.mulf %38, %43 : vector<16x128xf32>
      %cst_18 = arith.constant 1.000000e+00 : f32
      %45 = vector.broadcast %cst_18 : f32 to vector<16x128xf32>
      %46 = arith.subf %45, %18 : vector<16x128xf32>
      %47 = arith.mulf %44, %46 : vector<16x128xf32>
      %48 = arith.addf %47, %36 : vector<16x128xf32>
      %c0_19 = arith.constant 0 : index
      %c0_20 = arith.constant 0 : index
      %c0_21 = arith.constant 0 : index
      %49 = vector.load %arg4[%c0_19, %c0_20, %c0_21] : memref<1x8x128xf32, #tpu.memory_space<vmem>>, vector<1x8x128xf32>
      %50 = vector.shape_cast %48 : vector<16x128xf32> to vector<1x2x8x128xf32>
      %cst_22 = arith.constant dense<0.000000e+00> : vector<1x8x128xf32>
      %51 = vector.multi_reduction <add>, %50, %cst_22 [1] : vector<1x2x8x128xf32> to vector<1x8x128xf32>
      %52 = arith.addf %49, %51 : vector<1x8x128xf32>
      %c0_23 = arith.constant 0 : index
      %c0_24 = arith.constant 0 : index
      %c0_25 = arith.constant 0 : index
      %53 = vector.load %arg4[%c0_23, %c0_24, %c0_25] : memref<1x8x128xf32, #tpu.memory_space<vmem>>, vector<1x8x128xf32>
      tpu.vector_store %arg4[%c0_23, %c0_24, %c0_25], %52 {strides = array<i32>} : memref<1x8x128xf32, #tpu.memory_space<vmem>>, vector<1x8x128xf32>,
    } else {
    }
    %c16_i32_4 = arith.constant 16 : i32
    %10 = arith.addi %2, %c16_i32_4 : i32
    %c16_i32_5 = arith.constant 16 : i32
    %11 = arith.cmpi sgt, %10, %c16_i32_5 : i32
    %c16_i32_6 = arith.constant 16 : i32
    %12 = arith.cmpi slt, %2, %c16_i32_6 : i32
    %13 = arith.andi %11, %12 : i1
    %14 = arith.extui %13 : i1 to i32
    %c0_i32_7 = arith.constant 0 : i32
    %15 = arith.cmpi ne, %14, %c0_i32_7 : i32
    scf.if %15 {
      %c0 = arith.constant 0 : index
      %c0_8 = arith.constant 0 : index
      %16 = vector.load %arg2[%c0, %c0_8] : memref<16x128xf32, #tpu.memory_space<vmem>>, vector<16x128xf32>
      %c0_9 = arith.constant 0 : index
      %c0_10 = arith.constant 0 : index
      %17 = vector.load %arg3[%c0_9, %c0_10] : memref<16x128xbf16, #tpu.memory_space<vmem>>, vector<16x128xbf16>
      %18 = arith.extf %17 : vector<16x128xbf16> to vector<16x128xf32>
      %19 = arith.negf %16 : vector<16x128xf32>
      %20 = math.exp %19 : vector<16x128xf32>
      %cst = arith.constant 1.000000e+00 : f32
      %21 = vector.broadcast %cst : f32 to vector<16x128xf32>
      %22 = arith.addf %21, %20 : vector<16x128xf32>
      %23 = arith.divf %21, %22 : vector<16x128xf32>
      %cst_11 = arith.constant 1.000000e+00 : f32
      %24 = vector.broadcast %cst_11 : f32 to vector<16x128xf32>
      %25 = arith.subf %24, %23 : vector<16x128xf32>
      %cst_12 = arith.constant 1.000000e+00 : f32
      %26 = vector.broadcast %cst_12 : f32 to vector<16x128xf32>
      %27 = arith.subf %26, %23 : vector<16x128xf32>
      %28 = arith.mulf %25, %27 : vector<16x128xf32>
      %29 = arith.mulf %23, %23 : vector<16x128xf32>
      %cst_13 = arith.constant -2.500000e-01 : f32
      %30 = vector.broadcast %cst_13 : f32 to vector<16x128xf32>
      %31 = arith.mulf %30, %28 : vector<16x128xf32>
      %cst_14 = arith.constant 1.000000e-07 : f32
      %32 = vector.broadcast %cst_14 : f32 to vector<16x128xf32>
      %33 = arith.addf %23, %32 : vector<16x128xf32>
      %34 = math.log %33 : vector<16x128xf32>
      %35 = arith.mulf %31, %34 : vector<16x128xf32>
      %36 = arith.mulf %35, %18 : vector<16x128xf32>
      %cst_15 = arith.constant -7.500000e-01 : f32
      %37 = vector.broadcast %cst_15 : f32 to vector<16x128xf32>
      %38 = arith.mulf %37, %29 : vector<16x128xf32>
      %cst_16 = arith.constant 1.000000e+00 : f32
      %39 = vector.broadcast %cst_16 : f32 to vector<16x128xf32>
      %40 = arith.subf %39, %23 : vector<16x128xf32>
      %cst_17 = arith.constant 1.000000e-07 : f32
      %41 = vector.broadcast %cst_17 : f32 to vector<16x128xf32>
      %42 = arith.addf %40, %41 : vector<16x128xf32>
      %43 = math.log %42 : vector<16x128xf32>
      %44 = arith.mulf %38, %43 : vector<16x128xf32>
      %cst_18 = arith.constant 1.000000e+00 : f32
      %45 = vector.broadcast %cst_18 : f32 to vector<16x128xf32>
      %46 = arith.subf %45, %18 : vector<16x128xf32>
      %47 = arith.mulf %44, %46 : vector<16x128xf32>
      %48 = arith.addf %47, %36 : vector<16x128xf32>
      %49 = tpu.iota {dimensions = array<i32: 0>} : vector<16x128xi32>
      %c0_i32_19 = arith.constant 0 : i32
      %50 = arith.addi %2, %c0_i32_19 : i32
      %51 = vector.broadcast %50 : i32 to vector<16x128xi32>
      %52 = arith.addi %49, %51 : vector<16x128xi32>
      %c16_i32_20 = arith.constant 16 : i32
      %53 = vector.broadcast %c16_i32_20 : i32 to vector<16x128xi32>
      %54 = arith.cmpi slt, %52, %53 : vector<16x128xi32>
      %cst_21 = arith.constant 0.000000e+00 : f32
      %55 = vector.broadcast %cst_21 : f32 to vector<16x128xf32>
      %56 = arith.select %54, %48, %55 : vector<16x128xi1>, vector<16x128xf32>
      %c0_22 = arith.constant 0 : index
      %c0_23 = arith.constant 0 : index
      %c0_24 = arith.constant 0 : index
      %57 = vector.load %arg4[%c0_22, %c0_23, %c0_24] : memref<1x8x128xf32, #tpu.memory_space<vmem>>, vector<1x8x128xf32>
      %58 = vector.shape_cast %56 : vector<16x128xf32> to vector<1x2x8x128xf32>
      %cst_25 = arith.constant dense<0.000000e+00> : vector<1x8x128xf32>
      %59 = vector.multi_reduction <add>, %58, %cst_25 [1] : vector<1x2x8x128xf32> to vector<1x8x128xf32>
      %60 = arith.addf %57, %59 : vector<1x8x128xf32>
      %c0_26 = arith.constant 0 : index
      %c0_27 = arith.constant 0 : index
      %c0_28 = arith.constant 0 : index
      %61 = vector.load %arg4[%c0_26, %c0_27, %c0_28] : memref<1x8x128xf32, #tpu.memory_space<vmem>>, vector<1x8x128xf32>
      tpu.vector_store %arg4[%c0_26, %c0_27, %c0_28], %60 {strides = array<i32>} : memref<1x8x128xf32, #tpu.memory_space<vmem>>, vector<1x8x128xf32>,
    } else {
    }
    return
  }
  func.func @transform_0(%arg0: i32, %arg1: i32) -> (i32, i32) {
    %c1_i32 = arith.constant 1 : i32
    %0 = arith.muli %arg0, %c1_i32 : i32
    %1 = arith.addi %0, %arg1 : i32
    %c0_i32 = arith.constant 0 : i32
    %2 = arith.minsi %1, %c0_i32 : i32
    %c0_i32_0 = arith.constant 0 : i32
    %c0_i32_1 = arith.constant 0 : i32
    return %2, %c0_i32_0 : i32, i32
  }
  func.func @transform_1(%arg0: i32, %arg1: i32) -> (i32, i32) {
    %c1_i32 = arith.constant 1 : i32
    %0 = arith.muli %arg0, %c1_i32 : i32
    %1 = arith.addi %0, %arg1 : i32
    %c0_i32 = arith.constant 0 : i32
    %2 = arith.minsi %1, %c0_i32 : i32
    %c0_i32_0 = arith.constant 0 : i32
    %c0_i32_1 = arith.constant 0 : i32
    return %2, %c0_i32_0 : i32, i32
  }
  func.func @transform_2(%arg0: i32, %arg1: i32) -> (i32, i32, i32) {
    %c0_i32 = arith.constant 0 : i32
    %c0_i32_0 = arith.constant 0 : i32
    %c0_i32_1 = arith.constant 0 : i32
    return %arg0, %c0_i32, %c0_i32_0 : i32, i32, i32
  }
}

</mosaic_0001>

<llo_original>
// kernel: tpu_custom_call.1
$region0: #{tpu_custom_call.1}
  #allocation0 [shape = 'u32[]', space=smem, size = 0x4, offset = 0x4, fixed_abs, tag = 'smem constant byte address 0x4 - core index']
  #allocation1 [shape = 'u32[144,128]{1,0:T(1,128)}', space=vmem, size = 0x12000, scoped, tag = 'internal scratch']
  %s0 = inlined_call_operand.hbm [shape: f32[16,128], index: 0, kind: input, shape index: {}]
  %s1 = inlined_call_operand.hbm [shape: bf16[16,128], index: 1, kind: input, shape index: {}]
  %s2 = inlined_call_operand.hbm [shape: f32[1,8,128], index: 2, kind: output, shape index: {}]
  %s3 = sld [smem:[#allocation0]]
  $region38: #{tpu_custom_call.1} parent=0
    _
  %s5 = ssub.s32 1, %s3
  %s6 = scalar_select 0, %s5, %s3
  $region1: #{tpu_custom_call.1} parent=0
    #allocation2 [shape = 'u8[8192]{0}', space=vmem, size = 0x2000, scoped, tag = 'input window, operand 0, single buffered']
    #allocation3 [shape = 's32[1]{0}', space=sflag, size = 0x4, scoped, tag = 'scoped memory for tpu_custom_call.1']
    #allocation4 [shape = 's32[1]{0}', space=sflag, size = 0x4, scoped, tag = 'scoped memory for tpu_custom_call.1']
    #allocation5 [shape = 'u8[4096]{0}', space=vmem, size = 0x1000, scoped, tag = 'input window, operand 1, single buffered']
    #allocation6 [shape = 's32[1]{0}', space=sflag, size = 0x4, scoped, tag = 'scoped memory for tpu_custom_call.1']
    #allocation7 [shape = 'u8[4096]{0}', space=vmem, size = 0x1000, scoped, tag = 'output window, operand 0, single buffered']
    %7 = vsyncpa [#allocation3], 0
    %8 = vsyncpa [#allocation6], 0
    %9 = vsyncpa [#allocation4], 0
    // Predicated region
    $region2: #{tpu_custom_call.1} parent=1 // pred_check
      _
    $region3: #{tpu_custom_call.1} parent=1 // pred_check_branch
      %11 = sbr.rel (0) target = $region5
    $region4: #{tpu_custom_call.1} parent=1 // pred_region
      %s12 = sadd.s32 0, 0
      %p13 = scmp.lt.s32.totalorder %s12, 0
      %s14 = scalar_select %p13, %s12, 0
      %s15 = smul.u32 2, %s14
      %s17 = ssub.s32 256, 256
      %18 = vsyncadd [#allocation3], %s17
      %s19 = smul.addr %s15, 128
      %s20 = scalar_lea.hbm %s0, %s19
      %s21 = sshll.u32 [#allocation2], 4
      %s22 = int_to_ptr.vmem [resolvable:$true] %s21
      %27 = dma.hbm_to_vmem [thread:$0]  %s20, 256, %s22, [#allocation3], 128, 128, 8
    $region5: #{tpu_custom_call.1} parent=1 // pred_fallthru
      _
    // Predicated region
    $region6: #{tpu_custom_call.1} parent=1 // pred_check
      _
    $region7: #{tpu_custom_call.1} parent=1 // pred_check_branch
      %29 = sbr.rel (0) target = $region9
    $region8: #{tpu_custom_call.1} parent=1 // pred_region
      %s30 = sadd.s32 0, 0
      %p31 = scmp.lt.s32.totalorder %s30, 0
      %s32 = scalar_select %p31, %s30, 0
      %s33 = smul.u32 2, %s32
      %s35 = ssub.s32 128, 128
      %36 = vsyncadd [#allocation6], %s35
      %s37 = smul.addr %s33, 64
      %s38 = scalar_lea.hbm %s1, %s37
      %s39 = sshll.u32 [#allocation5], 4
      %s40 = int_to_ptr.vmem [resolvable:$true] %s39
      %45 = dma.hbm_to_vmem [thread:$0]  %s38, 128, %s40, [#allocation6], 64, 64, 4
    $region9: #{tpu_custom_call.1} parent=1 // pred_fallthru
      _
    // Predicated region
    $region10: #{tpu_custom_call.1} parent=1 // pred_check
      _
    $region11: #{tpu_custom_call.1} parent=1 // pred_check_branch
      %47 = sbr.rel (0) target = $region13
    $region12: #{tpu_custom_call.1} parent=1 // pred_region
      %48 = dma.done [#allocation3], 256
    $region13: #{tpu_custom_call.1} parent=1 // pred_fallthru
      _
    // Predicated region
    $region14: #{tpu_custom_call.1} parent=1 // pred_check
      _
    $region15: #{tpu_custom_call.1} parent=1 // pred_check_branch
      %50 = sbr.rel (0) target = $region17
    $region16: #{tpu_custom_call.1} parent=1 // pred_region
      %51 = dma.done [#allocation6], 128
    $region17: #{tpu_custom_call.1} parent=1 // pred_fallthru
      _
    %s52 = sadd.s32 0, 0
    %p53 = scmp.lt.s32.totalorder %s52, 0
    %s54 = scalar_select %p53, %s52, 0
    %s55 = smul.u32 2, %s54
    %s56 = sadd.s32 0, 0
    %p57 = scmp.lt.s32.totalorder %s56, 0
    %s58 = scalar_select %p57, %s56, 0
    %s59 = smul.u32 2, %s58
    %s60 = sadd.s32 0, 0
    %s61 = smul.u32 %s60, 16
    %p62 = scmp.eq.s32.totalorder 0, 0
    // Predicated region
    $region18: #{tpu_custom_call.1} parent=1 // pred_check
      %p63 = pneg %p62
    $region19: #{tpu_custom_call.1} parent=1 // pred_check_branch
      %65 = sbr.rel (%p63) target = $region21
    $region20: #{tpu_custom_call.1} parent=1 // pred_region
      %66 = vst [vmem:[#allocation7] sm:$0xff] 0.0
    $region21: #{tpu_custom_call.1} parent=1 // pred_fallthru
      _
    %s67 = sadd.s32 %s61, 16
    %p68 = scmp.le.s32.totalorder %s67, 16
    // Predicated region
    $region22: #{tpu_custom_call.1} parent=1 // pred_check
      %p69 = pneg %p68
    $region23: #{tpu_custom_call.1} parent=1 // pred_check_branch
      %71 = sbr.rel (%p69) target = $region25
    $region24: #{tpu_custom_call.1} parent=1 // pred_region
      %v72 = vld [vmem:[#allocation2] sm:$0xff]
      %v73 = vld [vmem:[#allocation2 + $0x8] sm:$0xff]
      %v74 = vld [vmem:[#allocation5] sm:$0xf]
      %v75 = vld [vmem:[#allocation5 + $0x4] sm:$0xf]
      %v76 = vunpack.c.l.bf16 %v74
      %v77 = vunpack.c.l.bf16 %v75
      %v78 = vxor.u32 %v72, 2147483648
      %v79 = vxor.u32 %v73, 2147483648
      %v80 = vmul.f32 %v78, 1.442695
      %v81 = vpow.pop %v80
      %v82 = vmul.f32 %v79, 1.442695
      %v83 = vpow.pop %v82
      %v84 = vadd.f32 %v81, 1.0
      %v85 = vadd.f32 %v83, 1.0
      %v86 = vrcp.pop %v84
      %v87 = vmul.f32 1.0, %v86
      %v88 = vrcp.pop %v85
      %v89 = vmul.f32 1.0, %v88
      %v90 = vsub.f32 1.0, %v87
      %v91 = vsub.f32 1.0, %v89
      %v92 = vmul.f32 %v90, %v90
      %v93 = vmul.f32 %v91, %v91
      %v94 = vmul.f32 %v87, %v87
      %v95 = vmul.f32 %v89, %v89
      %v96 = vmul.f32 %v92, -0.25
      %v97 = vmul.f32 %v93, -0.25
      %v98 = vadd.f32 %v87, 1e-07
      %v99 = vadd.f32 %v89, 1e-07
      %v100 = vlog2.pop %v98
      %v101 = vmul.f32 %v100, 0.6931472
      %v102 = vlog2.pop %v99
      %v103 = vmul.f32 %v102, 0.6931472
      %v104 = vmul.f32 %v96, %v101
      %v105 = vmul.f32 %v97, %v103
      %v106 = vmul.f32 %v104, %v76
      %v107 = vmul.f32 %v105, %v77
      %v108 = vmul.f32 %v94, -0.75
      %v109 = vmul.f32 %v95, -0.75
      %v110 = vadd.f32 %v90, 1e-07
      %v111 = vadd.f32 %v91, 1e-07
      %v112 = vlog2.pop %v110
      %v113 = vmul.f32 %v112, 0.6931472
      %v114 = vlog2.pop %v111
      %v115 = vmul.f32 %v114, 0.6931472
      %v116 = vmul.f32 %v108, %v113
      %v117 = vmul.f32 %v109, %v115
      %v118 = vsub.f32 1.0, %v76
      %v119 = vsub.f32 1.0, %v77
      %v120 = vmul.f32 %v116, %v118
      %v121 = vmul.f32 %v117, %v119
      %v122 = vadd.f32 %v120, %v106
      %v123 = vadd.f32 %v121, %v107
      %v124 = vld [vmem:[#allocation7] sm:$0xff]
      %v125 = vadd.f32 %v122, %v123
      %v126 = vadd.f32 %v124, %v125
      %127 = vst [vmem:[#allocation7] sm:$0xff] %v126
    $region25: #{tpu_custom_call.1} parent=1 // pred_fallthru
      _
    %p128 = scmp.gt.s32.totalorder %s67, 16
    %p129 = scmp.lt.s32.totalorder %s61, 16
    %p130 = pnand %p128, %p129
    %p131 = pneg %p130
    // Predicated region
    $region26: #{tpu_custom_call.1} parent=1 // pred_check
      _
    $region27: #{tpu_custom_call.1} parent=1 // pred_check_branch
      %133 = sbr.rel (%p130) target = $region29
    $region28: #{tpu_custom_call.1} parent=1 // pred_region
      %v134 = vld [vmem:[#allocation2] sm:$0xff]
      %v135 = vld [vmem:[#allocation2 + $0x8] sm:$0xff]
      %v136 = vld [vmem:[#allocation5] sm:$0xf]
      %v137 = vld [vmem:[#allocation5 + $0x4] sm:$0xf]
      %v138 = vunpack.c.l.bf16 %v136
      %v139 = vunpack.c.l.bf16 %v137
      %v140 = vxor.u32 %v134, 2147483648
      %v141 = vxor.u32 %v135, 2147483648
      %v142 = vmul.f32 %v140, 1.442695
      %v143 = vpow.pop %v142
      %v144 = vmul.f32 %v141, 1.442695
      %v145 = vpow.pop %v144
      %v146 = vadd.f32 %v143, 1.0
      %v147 = vadd.f32 %v145, 1.0
      %v148 = vrcp.pop %v146
      %v149 = vmul.f32 1.0, %v148
      %v150 = vrcp.pop %v147
      %v151 = vmul.f32 1.0, %v150
      %v152 = vsub.f32 1.0, %v149
      %v153 = vsub.f32 1.0, %v151
      %v154 = vmul.f32 %v152, %v152
      %v155 = vmul.f32 %v153, %v153
      %v156 = vmul.f32 %v149, %v149
      %v157 = vmul.f32 %v151, %v151
      %v158 = vmul.f32 %v154, -0.25
      %v159 = vmul.f32 %v155, -0.25
      %v160 = vadd.f32 %v149, 1e-07
      %v161 = vadd.f32 %v151, 1e-07
      %v162 = vlog2.pop %v160
      %v163 = vmul.f32 %v162, 0.6931472
      %v164 = vlog2.pop %v161
      %v165 = vmul.f32 %v164, 0.6931472
      %v166 = vmul.f32 %v158, %v163
      %v167 = vmul.f32 %v159, %v165
      %v168 = vmul.f32 %v166, %v138
      %v169 = vmul.f32 %v167, %v139
      %v170 = vmul.f32 %v156, -0.75
      %v171 = vmul.f32 %v157, -0.75
      %v172 = vadd.f32 %v152, 1e-07
      %v173 = vadd.f32 %v153, 1e-07
      %v174 = vlog2.pop %v172
      %v175 = vmul.f32 %v174, 0.6931472
      %v176 = vlog2.pop %v173
      %v177 = vmul.f32 %v176, 0.6931472
      %v178 = vmul.f32 %v170, %v175
      %v179 = vmul.f32 %v171, %v177
      %v180 = vsub.f32 1.0, %v138
      %v181 = vsub.f32 1.0, %v139
      %v182 = vmul.f32 %v178, %v180
      %v183 = vmul.f32 %v179, %v181
      %v184 = vadd.f32 %v182, %v168
      %v185 = vadd.f32 %v183, %v169
      %v186 = vlaneseq
      %v187 = vshrl.u32 %v186, 7
      %v188 = vadd.s32 %v187, 8
      %v189 = vstv %s61
      %v190 = vadd.s32 %v187, %v189
      %v191 = vadd.s32 %v188, %v189
      %vm192 = vcmp.lt.s32.totalorder %v190, 16
      %vm193 = vcmp.lt.s32.totalorder %v191, 16
      %v194 = vsel %vm192, %v184, 0.0
      %v195 = vsel %vm193, %v185, 0.0
      %v196 = vld [vmem:[#allocation7] sm:$0xff]
      %v197 = vadd.f32 %v194, %v195
      %v198 = vadd.f32 %v196, %v197
      %199 = vst [vmem:[#allocation7] sm:$0xff] %v198
    $region29: #{tpu_custom_call.1} parent=1 // pred_fallthru
      _
    // Predicated region
    $region30: #{tpu_custom_call.1} parent=1 // pred_check
      _
    $region31: #{tpu_custom_call.1} parent=1 // pred_check_branch
      %201 = sbr.rel (0) target = $region33
    $region32: #{tpu_custom_call.1} parent=1 // pred_region
      %s203 = ssub.s32 128, 128
      %204 = vsyncadd [#allocation4], %s203
      %s206 = sshll.u32 [#allocation7], 4
      %s207 = int_to_ptr.vmem [resolvable:$true] %s206
      %209 = dma.vmem_to_hbm [thread:$0]  %s207, 128, %s2, [#allocation4]
    $region33: #{tpu_custom_call.1} parent=1 // pred_fallthru
      _
    // Predicated region
    $region34: #{tpu_custom_call.1} parent=1 // pred_check
      _
    $region35: #{tpu_custom_call.1} parent=1 // pred_check_branch
      %211 = sbr.rel (0) target = $region37
    $region36: #{tpu_custom_call.1} parent=1 // pred_region
      %212 = dma.done [#allocation4], 128
    $region37: #{tpu_custom_call.1} parent=1 // pred_fallthru
      _
    %213 = vsyncpa [#allocation3], 1
    %214 = vsyncpa [#allocation6], 1
    %215 = vsyncpa [#allocation4], 1

</llo_original>
